<compile_context>
chip_gen: v5e
topology: v5e:2x2
jax: 0.10.0
libtpu: 0.0.40
codegen_flags: <defaults>
</compile_context>

<pallas_src>
import functools

import jax
import jax.numpy as jnp
from jax.experimental import pallas as pl
from jax.experimental.pallas import tpu as pltpu


def _round_up(x, m):
    return (x + m - 1) // m * m


def ffn_kernel(x_ref, w1t_ref, b1_ref, w2t_ref, b2_ref, g_ref, beta_ref, o_ref,
               *, h_chunk):
    """One (tm, d_in) row tile: matmul -> relu -> matmul -> residual -> LN."""
    x = x_ref[...]                                   # (tm, d_in), input dtype
    xf = x.astype(jnp.float32)

    wdt = w1t_ref.dtype
    xw = x.astype(wdt)
    h_pad = w1t_ref.shape[1]

    # Residual + bias of the second conv form the f32 accumulator.
    y = xf + b2_ref[...]                             # (tm, d_in) f32

    # Hidden dim in static chunks (chunk boundaries are multiples of 128) so
    # the f32 intermediate is capped at (tm, h_chunk).
    for c0 in range(0, h_pad, h_chunk):
        c1 = min(c0 + h_chunk, h_pad)
        # Conv1d(d_in -> d_hid, k=1)  ==  x @ W1^T + b1   (MXU, f32 acc)
        h = jnp.dot(xw, w1t_ref[:, c0:c1],
                    preferred_element_type=jnp.float32) + b1_ref[:, c0:c1]
        h = jnp.maximum(h, 0.0)                      # ReLU (VPU)
        # Conv1d(d_hid -> d_in, k=1)  ==  h @ W2^T
        y = y + jnp.dot(h.astype(wdt), w2t_ref[c0:c1, :],
                        preferred_element_type=jnp.float32)

    # dropout is identity in eval mode.
    # LayerNorm over d_in (no padding lanes -> no mask), eps = 1e-5.
    mean = jnp.mean(y, axis=-1, keepdims=True)
    yc = y - mean
    var = jnp.mean(yc * yc, axis=-1, keepdims=True)
    y_norm = yc * jax.lax.rsqrt(var + 1e-5)
    o_ref[...] = (y_norm * g_ref[...] + beta_ref[...]).astype(o_ref.dtype)


def make_ffn_params(w1, b1, w2, b2, gamma, beta, *, matmul_dtype=None):
    """One-time parameter prep: transpose, pad d_hid to a multiple of 128, cast.

    w1: (d_hid, d_in) Conv1d weight (k=1 squeezed); w2: (d_in, d_hid).
    d_in stays UNPADDED (activations are streamed exactly as-is from HBM).
    The padded hidden columns/rows are zero, so relu(0+0)=0 and the padded
    rows of W2^T contribute nothing.
    """
    d_hid, d_in = w1.shape
    h_pad = _round_up(d_hid, 128)
    wdt = matmul_dtype if matmul_dtype is not None else w1.dtype

    w1t = jnp.zeros((d_in, h_pad), wdt).at[:, :d_hid].set(w1.T.astype(wdt))
    w2t = jnp.zeros((h_pad, d_in), wdt).at[:d_hid, :].set(w2.T.astype(wdt))
    b1p = jnp.zeros((1, h_pad), jnp.float32).at[:, :d_hid].set(b1.astype(jnp.float32))
    b2p = b2.reshape(1, d_in).astype(jnp.float32)
    gp = gamma.reshape(1, d_in).astype(jnp.float32)
    bp = beta.reshape(1, d_in).astype(jnp.float32)
    return dict(w1t=w1t, b1=b1p, w2t=w2t, b2=b2p, gamma=gp, beta=bp,
                d_in=d_in, d_hid=d_hid)


def positionwise_ffn(x, params, *, tm=None):
    """x: (B, L, d_in); params from make_ffn_params. Returns (B, L, d_in)."""
    B, L, d_in = x.shape
    assert d_in == params["d_in"], "feature dim mismatch with w_1.in_channels"
    h_pad = params["w1t"].shape[1]
    rows = B * L

    x_bytes = jnp.dtype(x.dtype).itemsize
    w_bytes = jnp.dtype(params["w1t"].dtype).itemsize

    # ---- Generation-aware VMEM budget -------------------------------------
    try:
        vmem_cap = int(pltpu.get_tpu_info().vmem_capacity_bytes)
    except Exception:  # conservative default works on v5e/v6e/v7x alike
        vmem_cap = 64 * 1024 * 1024
    budget = vmem_cap // 2          # pipeline working set <= half of physical

    def est(tm_, hc_):
        act = 2 * 2 * tm_ * d_in * x_bytes          # x-in + out tiles, 2 bufs
        wts = 2 * d_in * h_pad * w_bytes            # W1^T + W2^T (1 buf each)
        small = 2 * (h_pad + 3 * d_in) * 4          # biases / gamma / beta
        tmp = tm_ * hc_ * 4 + 4 * tm_ * d_in * 4    # f32 h chunk + y/temps
        return act + wts + small + tmp

    # Row tile: big on 128 MiB chips (v5e/v6e), moderate on v7x (64 MiB).
    if tm is None:
        tm = 1024 if vmem_cap > 96 * 1024 * 1024 else 512
    tm = max(8, _round_up(tm, 8))
    tm = min(tm, _round_up(rows, 8))                 # no bigger than problem

    # Hidden chunk: cap the f32 intermediate; shrink it before shrinking tm.
    h_chunk = min(h_pad, 1024)
    while h_chunk > 128 and est(tm, h_chunk) > budget:
        h_chunk = max(128, (h_chunk // 2) // 128 * 128)
    while tm > 8 and est(tm, h_chunk) > budget:
        tm = max(8, _round_up(tm // 2, 8))

    # v7x megacore: keep >= 2 grid steps for large problems so both TCs work.
    if rows >= 512 and pl.cdiv(rows, tm) < 2:
        tm = _round_up(pl.cdiv(rows, 2), 8)

    grid = (pl.cdiv(rows, tm),)

    # Never request all of physical VMEM (v7x has only 64 MiB per TC).
    vmem_limit = int(min(vmem_cap * 3 // 4,
                         max(32 * 1024 * 1024, 2 * est(tm, h_chunk))))

    cost = pl.CostEstimate(
        flops=4 * rows * d_in * h_pad + 10 * rows * d_in,
        transcendentals=rows,
        bytes_accessed=(2 * rows * d_in * x_bytes
                        + 2 * d_in * h_pad * w_bytes
                        + (h_pad + 3 * d_in) * 4),
    )

    kernel = functools.partial(ffn_kernel, h_chunk=h_chunk)
    x2 = x.reshape(rows, d_in)      # free (contiguous) — no padding, no copy

    def _specs(single_buffer_weights):
        # Constant index_map => fetched once; Buffered(1) drops the unused
        # second VMEM buffer for these resident operands.
        pm = ({"pipeline_mode": pl.Buffered(1)}
              if single_buffer_weights else {})
        const = lambda i: (0, 0)
        return [
            pl.BlockSpec((tm, d_in), lambda i: (i, 0)),            # x tile
            pl.BlockSpec((d_in, h_pad), const, **pm),              # W1^T
            pl.BlockSpec((1, h_pad), const, **pm),                 # b1
            pl.BlockSpec((h_pad, d_in), const, **pm),              # W2^T
            pl.BlockSpec((1, d_in), const, **pm),                  # b2
            pl.BlockSpec((1, d_in), const, **pm),                  # gamma
            pl.BlockSpec((1, d_in), const, **pm),                  # beta
        ]

    def _call(single_buffer_weights):
        return pl.pallas_call(
            kernel,
            out_shape=jax.ShapeDtypeStruct((rows, d_in), x.dtype),
            grid_spec=pltpu.PrefetchScalarGridSpec(
                num_scalar_prefetch=0,
                grid=grid,
                in_specs=_specs(single_buffer_weights),
                out_specs=pl.BlockSpec((tm, d_in), lambda i: (i, 0)),
            ),
            compiler_params=pltpu.CompilerParams(
                dimension_semantics=("parallel",),
                vmem_limit_bytes=vmem_limit),
            cost_estimate=cost,
        )(x2, params["w1t"], params["b1"], params["w2t"], params["b2"],
          params["gamma"], params["beta"])

    try:
        out2 = _call(True)
    except Exception:
        # TODO(synk): fallback if this jax build rejects pipeline_mode on
        # pallas_call BlockSpecs — default double-buffering for weights.
        out2 = _call(False)

    return out2.reshape(B, L, d_in)   # free — no slicing, no extra HBM pass


def reference_ffn(x, w1, b1, w2, b2, gamma, beta, eps=1e-5):
    h = jnp.maximum(jnp.einsum('bld,hd->blh', x, w1) + b1, 0.0)
    y = jnp.einsum('blh,dh->bld', h, w2) + b2
    y = y + x
    mean = jnp.mean(y, axis=-1, keepdims=True)
    var = jnp.mean(jnp.square(y - mean), axis=-1, keepdims=True)
    return (y - mean) * jax.lax.rsqrt(var + eps) * gamma + beta


if __name__ == "__main__":
    B, L, d_in, d_hid = 2, 8, 32, 64
    key = jax.random.PRNGKey(0)
    kx, k1, k2, k3, k4 = jax.random.split(key, 5)

    x = jax.random.normal(kx, (B, L, d_in), dtype=jnp.float32)

    # Deterministic parameters (PyTorch Conv1d shapes with the k=1 dim squeezed).
    w1 = jax.random.normal(k1, (d_hid, d_in), dtype=jnp.float32) * (1.0 / jnp.sqrt(d_in))
    b1 = jax.random.normal(k2, (d_hid,), dtype=jnp.float32) * 0.01
    w2 = jax.random.normal(k3, (d_in, d_hid), dtype=jnp.float32) * (1.0 / jnp.sqrt(d_hid))
    b2 = jax.random.normal(k4, (d_in,), dtype=jnp.float32) * 0.01
    gamma = jnp.ones((d_in,), dtype=jnp.float32)
    beta = jnp.zeros((d_in,), dtype=jnp.float32)

    ref = reference_ffn(x, w1, b1, w2, b2, gamma, beta)

    # f32 path (matches PyTorch-default precision).
    params_f32 = make_ffn_params(w1, b1, w2, b2, gamma, beta)
    out = jax.block_until_ready(positionwise_ffn(x, params_f32))
    assert out.shape == (B, L, d_in)
    assert jnp.allclose(out, ref, atol=1e-5, rtol=1e-5)

    # bf16-weight path (MXU-friendly); residual + LayerNorm stay f32.
    params_bf16 = make_ffn_params(w1, b1, w2, b2, gamma, beta,
                                  matmul_dtype=jnp.bfloat16)
    out_bf16 = jax.block_until_ready(positionwise_ffn(x, params_bf16))
    assert out_bf16.shape == (B, L, d_in)
    assert jnp.allclose(out_bf16, ref, atol=0.25, rtol=0.02)

    print("KERNEL_OK")
</pallas_src>

<mosaic_0001>
module attributes {stable_mosaic.version = 11 : i64} {
  func.func @ffn_kernel(%arg0: i32, %arg1: memref<16x32xf32, #tpu.memory_space<vmem>>, %arg2: memref<32x128xf32, #tpu.memory_space<vmem>>, %arg3: memref<1x128xf32, #tpu.memory_space<vmem>>, %arg4: memref<128x32xf32, #tpu.memory_space<vmem>>, %arg5: memref<1x32xf32, #tpu.memory_space<vmem>>, %arg6: memref<1x32xf32, #tpu.memory_space<vmem>>, %arg7: memref<1x32xf32, #tpu.memory_space<vmem>>, %arg8: memref<16x32xf32, #tpu.memory_space<vmem>>) attributes {dimension_semantics = [#tpu.dimension_semantics<parallel>], iteration_bounds = array<i64: 1>, scalar_prefetch = 0 : i64, scratch_operands = 0 : i64, tpu.core_type = #tpu.core_type<tc>, window_params = [{transform_indices = @transform_0, window_bounds = array<i64: 16, 32>}, {pipeline_mode = #tpu.pipeline_mode<synchronous>, transform_indices = @transform_1, window_bounds = array<i64: 32, 128>}, {pipeline_mode = #tpu.pipeline_mode<synchronous>, transform_indices = @transform_2, window_bounds = array<i64: 1, 128>}, {pipeline_mode = #tpu.pipeline_mode<synchronous>, transform_indices = @transform_3, window_bounds = array<i64: 128, 32>}, {pipeline_mode = #tpu.pipeline_mode<synchronous>, transform_indices = @transform_4, window_bounds = array<i64: 1, 32>}, {pipeline_mode = #tpu.pipeline_mode<synchronous>, transform_indices = @transform_5, window_bounds = array<i64: 1, 32>}, {pipeline_mode = #tpu.pipeline_mode<synchronous>, transform_indices = @transform_6, window_bounds = array<i64: 1, 32>}, {transform_indices = @transform_7, window_bounds = array<i64: 16, 32>}]} {
    %c0 = arith.constant 0 : index
    %c0_0 = arith.constant 0 : index
    %0 = vector.load %arg1[%c0, %c0_0] : memref<16x32xf32, #tpu.memory_space<vmem>>, vector<16x32xf32>
    %c0_1 = arith.constant 0 : index
    %c0_2 = arith.constant 0 : index
    %1 = vector.load %arg5[%c0_1, %c0_2] : memref<1x32xf32, #tpu.memory_space<vmem>>, vector<1x32xf32>
    %2 = vector.broadcast %1 : vector<1x32xf32> to vector<16x32xf32>
    %3 = arith.addf %0, %2 : vector<16x32xf32>
    %c0_3 = arith.constant 0 : index
    %c0_4 = arith.constant 0 : index
    %4 = vector.load %arg2[%c0_3, %c0_4] : memref<32x128xf32, #tpu.memory_space<vmem>>, vector<32x128xf32>
    %cst = arith.constant dense<0.000000e+00> : vector<16x128xf32>
    %5 = tpu.matmul %0, %4, %cst {dimension_numbers = #tpu.dot_dimension_numbers<[1], [0], [0], [1], [0, 0, 1, 1], [], []>} : vector<16x32xf32>, vector<32x128xf32>, vector<16x128xf32> -> vector<16x128xf32>
    %c0_5 = arith.constant 0 : index
    %c0_6 = arith.constant 0 : index
    %6 = vector.load %arg3[%c0_5, %c0_6] : memref<1x128xf32, #tpu.memory_space<vmem>>, vector<1x128xf32>
    %7 = vector.broadcast %6 : vector<1x128xf32> to vector<16x128xf32>
    %8 = arith.addf %5, %7 : vector<16x128xf32>
    %cst_7 = arith.constant 0.000000e+00 : f32
    %9 = vector.broadcast %cst_7 : f32 to vector<16x128xf32>
    %10 = arith.maximumf %8, %9 : vector<16x128xf32>
    %c0_8 = arith.constant 0 : index
    %c0_9 = arith.constant 0 : index
    %11 = vector.load %arg4[%c0_8, %c0_9] : memref<128x32xf32, #tpu.memory_space<vmem>>, vector<128x32xf32>
    %cst_10 = arith.constant dense<0.000000e+00> : vector<16x32xf32>
    %12 = tpu.matmul %10, %11, %cst_10 {dimension_numbers = #tpu.dot_dimension_numbers<[1], [0], [0], [1], [0, 0, 1, 1], [], []>} : vector<16x128xf32>, vector<128x32xf32>, vector<16x32xf32> -> vector<16x32xf32>
    %13 = arith.addf %3, %12 : vector<16x32xf32>
    %cst_11 = arith.constant dense<0.000000e+00> : vector<16xf32>
    %14 = vector.multi_reduction <add>, %13, %cst_11 [1] : vector<16x32xf32> to vector<16xf32>
    %15 = vector.shape_cast %14 : vector<16xf32> to vector<16x1xf32>
    %cst_12 = arith.constant 3.200000e+01 : f32
    %16 = vector.broadcast %cst_12 : f32 to vector<16x1xf32>
    %17 = arith.divf %15, %16 : vector<16x1xf32>
    %18 = vector.broadcast %17 : vector<16x1xf32> to vector<16x32xf32>
    %19 = arith.subf %13, %18 : vector<16x32xf32>
    %20 = arith.mulf %19, %19 : vector<16x32xf32>
    %cst_13 = arith.constant dense<0.000000e+00> : vector<16xf32>
    %21 = vector.multi_reduction <add>, %20, %cst_13 [1] : vector<16x32xf32> to vector<16xf32>
    %22 = vector.shape_cast %21 : vector<16xf32> to vector<16x1xf32>
    %cst_14 = arith.constant 3.200000e+01 : f32
    %23 = vector.broadcast %cst_14 : f32 to vector<16x1xf32>
    %24 = arith.divf %22, %23 : vector<16x1xf32>
    %cst_15 = arith.constant 9.99999974E-6 : f32
    %25 = vector.broadcast %cst_15 : f32 to vector<16x1xf32>
    %26 = arith.addf %24, %25 : vector<16x1xf32>
    %27 = math.rsqrt %26 : vector<16x1xf32>
    %28 = vector.broadcast %27 : vector<16x1xf32> to vector<16x32xf32>
    %29 = arith.mulf %19, %28 : vector<16x32xf32>
    %c0_16 = arith.constant 0 : index
    %c0_17 = arith.constant 0 : index
    %30 = vector.load %arg6[%c0_16, %c0_17] : memref<1x32xf32, #tpu.memory_space<vmem>>, vector<1x32xf32>
    %31 = vector.broadcast %30 : vector<1x32xf32> to vector<16x32xf32>
    %32 = arith.mulf %29, %31 : vector<16x32xf32>
    %c0_18 = arith.constant 0 : index
    %c0_19 = arith.constant 0 : index
    %33 = vector.load %arg7[%c0_18, %c0_19] : memref<1x32xf32, #tpu.memory_space<vmem>>, vector<1x32xf32>
    %34 = vector.broadcast %33 : vector<1x32xf32> to vector<16x32xf32>
    %35 = arith.addf %32, %34 : vector<16x32xf32>
    %c0_20 = arith.constant 0 : index
    %c0_21 = arith.constant 0 : index
    %36 = vector.load %arg8[%c0_20, %c0_21] : memref<16x32xf32, #tpu.memory_space<vmem>>, vector<16x32xf32>
    tpu.vector_store %arg8[%c0_20, %c0_21], %35 {strides = array<i32>} : memref<16x32xf32, #tpu.memory_space<vmem>>, vector<16x32xf32>,
    return
  }
  func.func @transform_0(%arg0: i32) -> (i32, i32) {
    %c0_i32 = arith.constant 0 : i32
    %c0_i32_0 = arith.constant 0 : i32
    return %arg0, %c0_i32 : i32, i32
  }
  func.func @transform_1(%arg0: i32) -> (i32, i32) {
    %c0_i32 = arith.constant 0 : i32
    %c0_i32_0 = arith.constant 0 : i32
    %c0_i32_1 = arith.constant 0 : i32
    return %c0_i32, %c0_i32_0 : i32, i32
  }
  func.func @transform_2(%arg0: i32) -> (i32, i32) {
    %c0_i32 = arith.constant 0 : i32
    %c0_i32_0 = arith.constant 0 : i32
    %c0_i32_1 = arith.constant 0 : i32
    return %c0_i32, %c0_i32_0 : i32, i32
  }
  func.func @transform_3(%arg0: i32) -> (i32, i32) {
    %c0_i32 = arith.constant 0 : i32
    %c0_i32_0 = arith.constant 0 : i32
    %c0_i32_1 = arith.constant 0 : i32
    return %c0_i32, %c0_i32_0 : i32, i32
  }
  func.func @transform_4(%arg0: i32) -> (i32, i32) {
    %c0_i32 = arith.constant 0 : i32
    %c0_i32_0 = arith.constant 0 : i32
    %c0_i32_1 = arith.constant 0 : i32
    return %c0_i32, %c0_i32_0 : i32, i32
  }
  func.func @transform_5(%arg0: i32) -> (i32, i32) {
    %c0_i32 = arith.constant 0 : i32
    %c0_i32_0 = arith.constant 0 : i32
    %c0_i32_1 = arith.constant 0 : i32
    return %c0_i32, %c0_i32_0 : i32, i32
  }
  func.func @transform_6(%arg0: i32) -> (i32, i32) {
    %c0_i32 = arith.constant 0 : i32
    %c0_i32_0 = arith.constant 0 : i32
    %c0_i32_1 = arith.constant 0 : i32
    return %c0_i32, %c0_i32_0 : i32, i32
  }
  func.func @transform_7(%arg0: i32) -> (i32, i32) {
    %c0_i32 = arith.constant 0 : i32
    %c0_i32_0 = arith.constant 0 : i32
    return %arg0, %c0_i32 : i32, i32
  }
}

module attributes {stable_mosaic.version = 11 : i64} {
  func.func @ffn_kernel(%arg0: i32, %arg1: memref<16x32xf32, #tpu.memory_space<vmem>>, %arg2: memref<32x128xf32, #tpu.memory_space<vmem>>, %arg3: memref<1x128xf32, #tpu.memory_space<vmem>>, %arg4: memref<128x32xf32, #tpu.memory_space<vmem>>, %arg5: memref<1x32xf32, #tpu.memory_space<vmem>>, %arg6: memref<1x32xf32, #tpu.memory_space<vmem>>, %arg7: memref<1x32xf32, #tpu.memory_space<vmem>>, %arg8: memref<16x32xf32, #tpu.memory_space<vmem>>) attributes {dimension_semantics = [#tpu.dimension_semantics<parallel>], iteration_bounds = array<i64: 1>, scalar_prefetch = 0 : i64, scratch_operands = 0 : i64, tpu.core_type = #tpu.core_type<tc>, window_params = [{transform_indices = @transform_0, window_bounds = array<i64: 16, 32>}, {pipeline_mode = #tpu.pipeline_mode<synchronous>, transform_indices = @transform_1, window_bounds = array<i64: 32, 128>}, {pipeline_mode = #tpu.pipeline_mode<synchronous>, transform_indices = @transform_2, window_bounds = array<i64: 1, 128>}, {pipeline_mode = #tpu.pipeline_mode<synchronous>, transform_indices = @transform_3, window_bounds = array<i64: 128, 32>}, {pipeline_mode = #tpu.pipeline_mode<synchronous>, transform_indices = @transform_4, window_bounds = array<i64: 1, 32>}, {pipeline_mode = #tpu.pipeline_mode<synchronous>, transform_indices = @transform_5, window_bounds = array<i64: 1, 32>}, {pipeline_mode = #tpu.pipeline_mode<synchronous>, transform_indices = @transform_6, window_bounds = array<i64: 1, 32>}, {transform_indices = @transform_7, window_bounds = array<i64: 16, 32>}]} {
    %c0 = arith.constant 0 : index
    %c0_0 = arith.constant 0 : index
    %0 = vector.load %arg1[%c0, %c0_0] : memref<16x32xf32, #tpu.memory_space<vmem>>, vector<16x32xf32>
    %c0_1 = arith.constant 0 : index
    %c0_2 = arith.constant 0 : index
    %1 = vector.load %arg5[%c0_1, %c0_2] : memref<1x32xf32, #tpu.memory_space<vmem>>, vector<1x32xf32>
    %2 = vector.broadcast %1 : vector<1x32xf32> to vector<16x32xf32>
    %3 = arith.addf %0, %2 : vector<16x32xf32>
    %c0_3 = arith.constant 0 : index
    %c0_4 = arith.constant 0 : index
    %4 = vector.load %arg2[%c0_3, %c0_4] : memref<32x128xf32, #tpu.memory_space<vmem>>, vector<32x128xf32>
    %cst = arith.constant dense<0.000000e+00> : vector<16x128xf32>
    %5 = tpu.matmul %0, %4, %cst {dimension_numbers = #tpu.dot_dimension_numbers<[1], [0], [0], [1], [0, 0, 1, 1], [], []>} : vector<16x32xf32>, vector<32x128xf32>, vector<16x128xf32> -> vector<16x128xf32>
    %c0_5 = arith.constant 0 : index
    %c0_6 = arith.constant 0 : index
    %6 = vector.load %arg3[%c0_5, %c0_6] : memref<1x128xf32, #tpu.memory_space<vmem>>, vector<1x128xf32>
    %7 = vector.broadcast %6 : vector<1x128xf32> to vector<16x128xf32>
    %8 = arith.addf %5, %7 : vector<16x128xf32>
    %cst_7 = arith.constant 0.000000e+00 : f32
    %9 = vector.broadcast %cst_7 : f32 to vector<16x128xf32>
    %10 = arith.maximumf %8, %9 : vector<16x128xf32>
    %c0_8 = arith.constant 0 : index
    %c0_9 = arith.constant 0 : index
    %11 = vector.load %arg4[%c0_8, %c0_9] : memref<128x32xf32, #tpu.memory_space<vmem>>, vector<128x32xf32>
    %cst_10 = arith.constant dense<0.000000e+00> : vector<16x32xf32>
    %12 = tpu.matmul %10, %11, %cst_10 {dimension_numbers = #tpu.dot_dimension_numbers<[1], [0], [0], [1], [0, 0, 1, 1], [], []>} : vector<16x128xf32>, vector<128x32xf32>, vector<16x32xf32> -> vector<16x32xf32>
    %13 = arith.addf %3, %12 : vector<16x32xf32>
    %cst_11 = arith.constant dense<0.000000e+00> : vector<16xf32>
    %14 = vector.multi_reduction <add>, %13, %cst_11 [1] : vector<16x32xf32> to vector<16xf32>
    %15 = vector.shape_cast %14 : vector<16xf32> to vector<16x1xf32>
    %cst_12 = arith.constant 3.200000e+01 : f32
    %16 = vector.broadcast %cst_12 : f32 to vector<16x1xf32>
    %17 = arith.divf %15, %16 : vector<16x1xf32>
    %18 = vector.broadcast %17 : vector<16x1xf32> to vector<16x32xf32>
    %19 = arith.subf %13, %18 : vector<16x32xf32>
    %20 = arith.mulf %19, %19 : vector<16x32xf32>
    %cst_13 = arith.constant dense<0.000000e+00> : vector<16xf32>
    %21 = vector.multi_reduction <add>, %20, %cst_13 [1] : vector<16x32xf32> to vector<16xf32>
    %22 = vector.shape_cast %21 : vector<16xf32> to vector<16x1xf32>
    %cst_14 = arith.constant 3.200000e+01 : f32
    %23 = vector.broadcast %cst_14 : f32 to vector<16x1xf32>
    %24 = arith.divf %22, %23 : vector<16x1xf32>
    %cst_15 = arith.constant 9.99999974E-6 : f32
    %25 = vector.broadcast %cst_15 : f32 to vector<16x1xf32>
    %26 = arith.addf %24, %25 : vector<16x1xf32>
    %27 = math.rsqrt %26 : vector<16x1xf32>
    %28 = vector.broadcast %27 : vector<16x1xf32> to vector<16x32xf32>
    %29 = arith.mulf %19, %28 : vector<16x32xf32>
    %c0_16 = arith.constant 0 : index
    %c0_17 = arith.constant 0 : index
    %30 = vector.load %arg6[%c0_16, %c0_17] : memref<1x32xf32, #tpu.memory_space<vmem>>, vector<1x32xf32>
    %31 = vector.broadcast %30 : vector<1x32xf32> to vector<16x32xf32>
    %32 = arith.mulf %29, %31 : vector<16x32xf32>
    %c0_18 = arith.constant 0 : index
    %c0_19 = arith.constant 0 : index
    %33 = vector.load %arg7[%c0_18, %c0_19] : memref<1x32xf32, #tpu.memory_space<vmem>>, vector<1x32xf32>
    %34 = vector.broadcast %33 : vector<1x32xf32> to vector<16x32xf32>
    %35 = arith.addf %32, %34 : vector<16x32xf32>
    %c0_20 = arith.constant 0 : index
    %c0_21 = arith.constant 0 : index
    %36 = vector.load %arg8[%c0_20, %c0_21] : memref<16x32xf32, #tpu.memory_space<vmem>>, vector<16x32xf32>
    tpu.vector_store %arg8[%c0_20, %c0_21], %35 {strides = array<i32>} : memref<16x32xf32, #tpu.memory_space<vmem>>, vector<16x32xf32>,
    return
  }
  func.func @transform_0(%arg0: i32) -> (i32, i32) {
    %c0_i32 = arith.constant 0 : i32
    %c0_i32_0 = arith.constant 0 : i32
    return %arg0, %c0_i32 : i32, i32
  }
  func.func @transform_1(%arg0: i32) -> (i32, i32) {
    %c0_i32 = arith.constant 0 : i32
    %c0_i32_0 = arith.constant 0 : i32
    %c0_i32_1 = arith.constant 0 : i32
    return %c0_i32, %c0_i32_0 : i32, i32
  }
  func.func @transform_2(%arg0: i32) -> (i32, i32) {
    %c0_i32 = arith.constant 0 : i32
    %c0_i32_0 = arith.constant 0 : i32
    %c0_i32_1 = arith.constant 0 : i32
    return %c0_i32, %c0_i32_0 : i32, i32
  }
  func.func @transform_3(%arg0: i32) -> (i32, i32) {
    %c0_i32 = arith.constant 0 : i32
    %c0_i32_0 = arith.constant 0 : i32
    %c0_i32_1 = arith.constant 0 : i32
    return %c0_i32, %c0_i32_0 : i32, i32
  }
  func.func @transform_4(%arg0: i32) -> (i32, i32) {
    %c0_i32 = arith.constant 0 : i32
    %c0_i32_0 = arith.constant 0 : i32
    %c0_i32_1 = arith.constant 0 : i32
    return %c0_i32, %c0_i32_0 : i32, i32
  }
  func.func @transform_5(%arg0: i32) -> (i32, i32) {
    %c0_i32 = arith.constant 0 : i32
    %c0_i32_0 = arith.constant 0 : i32
    %c0_i32_1 = arith.constant 0 : i32
    return %c0_i32, %c0_i32_0 : i32, i32
  }
  func.func @transform_6(%arg0: i32) -> (i32, i32) {
    %c0_i32 = arith.constant 0 : i32
    %c0_i32_0 = arith.constant 0 : i32
    %c0_i32_1 = arith.constant 0 : i32
    return %c0_i32, %c0_i32_0 : i32, i32
  }
  func.func @transform_7(%arg0: i32) -> (i32, i32) {
    %c0_i32 = arith.constant 0 : i32
    %c0_i32_0 = arith.constant 0 : i32
    return %arg0, %c0_i32 : i32, i32
  }
}

</mosaic_0001>

<llo_original>
// kernel: tpu_custom_call.1
$region0: #{tpu_custom_call.1}
  #allocation0 [shape = 'u32[]', space=smem, size = 0x4, offset = 0x4, fixed_abs, tag = 'smem constant byte address 0x4 - core index']
  #allocation1 [shape = 'u32[72,128]{1,0:T(1,128)}', space=vmem, size = 0x9000, scoped, tag = 'internal scratch']
  %s0 = inlined_call_operand.vmem [shape: f32[16,32], index: 0, kind: input, shape index: {}]
  %s1 = inlined_call_operand.vmem [shape: f32[32,128], index: 1, kind: input, shape index: {}]
  %s2 = inlined_call_operand.vmem [shape: f32[1,128], index: 2, kind: input, shape index: {}]
  %s3 = inlined_call_operand.vmem [shape: f32[128,32], index: 3, kind: input, shape index: {}]
  %s4 = inlined_call_operand.vmem [shape: f32[1,32], index: 4, kind: input, shape index: {}]
  %s5 = inlined_call_operand.vmem [shape: f32[1,32], index: 5, kind: input, shape index: {}]
  %s6 = inlined_call_operand.vmem [shape: f32[1,32], index: 6, kind: input, shape index: {}]
  %s7 = inlined_call_operand.hbm [shape: f32[16,32], index: 7, kind: output, shape index: {}]
  %s8 = sld [smem:[#allocation0]]
  $region38: #{tpu_custom_call.1} parent=0
    _
  %s10 = ssub.s32 1, %s8
  %s11 = scalar_select 0, %s10, %s8
  $region1: #{tpu_custom_call.1} parent=0
    #allocation2 [shape = 'u8[8192]{0}', space=vmem, size = 0x2000, scoped, tag = 'output window, operand 0, single buffered']
    #allocation3 [shape = 's32[1]{0}', space=sflag, size = 0x4, scoped, tag = 'scoped memory for tpu_custom_call.1']
    %12 = vsyncpa [#allocation3], 0
    // Predicated region
    $region2: #{tpu_custom_call.1} parent=1 // pred_check
      _
    $region3: #{tpu_custom_call.1} parent=1 // pred_check_branch
      %14 = sbr.rel (0) target = $region5
    $region4: #{tpu_custom_call.1} parent=1 // pred_region
      _
    $region5: #{tpu_custom_call.1} parent=1 // pred_fallthru
      _
    // Predicated region
    $region6: #{tpu_custom_call.1} parent=1 // pred_check
      _
    $region7: #{tpu_custom_call.1} parent=1 // pred_check_branch
      %16 = sbr.rel (0) target = $region9
    $region8: #{tpu_custom_call.1} parent=1 // pred_region
      _
    $region9: #{tpu_custom_call.1} parent=1 // pred_fallthru
      _
    // Predicated region
    $region10: #{tpu_custom_call.1} parent=1 // pred_check
      _
    $region11: #{tpu_custom_call.1} parent=1 // pred_check_branch
      %18 = sbr.rel (0) target = $region13
    $region12: #{tpu_custom_call.1} parent=1 // pred_region
      _
    $region13: #{tpu_custom_call.1} parent=1 // pred_fallthru
      _
    // Predicated region
    $region14: #{tpu_custom_call.1} parent=1 // pred_check
      _
    $region15: #{tpu_custom_call.1} parent=1 // pred_check_branch
      %20 = sbr.rel (0) target = $region17
    $region16: #{tpu_custom_call.1} parent=1 // pred_region
      _
    $region17: #{tpu_custom_call.1} parent=1 // pred_fallthru
      _
    // Predicated region
    $region18: #{tpu_custom_call.1} parent=1 // pred_check
      _
    $region19: #{tpu_custom_call.1} parent=1 // pred_check_branch
      %22 = sbr.rel (0) target = $region21
    $region20: #{tpu_custom_call.1} parent=1 // pred_region
      _
    $region21: #{tpu_custom_call.1} parent=1 // pred_fallthru
      _
    // Predicated region
    $region22: #{tpu_custom_call.1} parent=1 // pred_check
      _
    $region23: #{tpu_custom_call.1} parent=1 // pred_check_branch
      %24 = sbr.rel (0) target = $region25
    $region24: #{tpu_custom_call.1} parent=1 // pred_region
      _
    $region25: #{tpu_custom_call.1} parent=1 // pred_fallthru
      _
    // Predicated region
    $region26: #{tpu_custom_call.1} parent=1 // pred_check
      _
    $region27: #{tpu_custom_call.1} parent=1 // pred_check_branch
      %26 = sbr.rel (0) target = $region29
    $region28: #{tpu_custom_call.1} parent=1 // pred_region
      _
    $region29: #{tpu_custom_call.1} parent=1 // pred_fallthru
      _
    %v27 = vld [vmem:[%s0] sm:$0xff]
    %v28 = vld [vmem:[%s0 + $0x8] sm:$0xff]
    %v29 = vld [vmem:[%s4] sm:$0x1]
    %v31 = vperm.slane %v29, 0
    %v33 = vadd.f32 %v27, %v31
    %v34 = vadd.f32 %v28, %v31
    %v35 = vld [vmem:[%s1] sm:$0xff]
    %v36 = vld [vmem:[%s1 + $0x8] sm:$0xff]
    %v37 = vld [vmem:[%s1 + $0x10] sm:$0xff]
    %v38 = vld [vmem:[%s1 + $0x18] sm:$0xff]
    %v39 = vld [vmem:[%s2] sm:$0x1]
    %v41 = vperm.slane %v39, 0
    %vm43 = vcmask 261120
    %v45 = vsel %vm43, %v27, 0
    %v48 = vsel %vm43, %v28, 0
    %50 = vmatpush.msra.mxu0 0.0
    %51 = vmatpush.msra.mxu0 0.0
    %52 = vmatpush.msra.mxu0 0.0
    %53 = vmatpush.msra.mxu0 0.0
    %54 = vmatpush.msra.mxu0 0.0
    %55 = vmatpush.msra.mxu0 0.0
    %56 = vmatpush.msra.mxu0 0.0
    %57 = vmatpush.msra.mxu0 0.0
    %58 = vmatpush.msra.mxu0 0.0
    %59 = vmatpush.msra.mxu0 0.0
    %60 = vmatpush.msra.mxu0 0.0
    %61 = vmatpush.msra.mxu0 0.0
    %62 = vmatpush.msra.mxu0 %v38
    %63 = vmatpush.msra.mxu0 %v37
    %64 = vmatpush.msra.mxu0 %v36
    %65 = vmatpush.msra.mxu0 %v35
    %66 = vmatmul.f32.gmra.mxu0 %v45
    %v67 = vpop.f32.mrf.mxu0
    %v68 = vadd.f32 %v41, %v67
    %69 = vmatmul.f32.gmra.mxu0 %v48
    %v70 = vpop.f32.mrf.mxu0
    %v71 = vadd.f32 %v41, %v70
    %72 = vdwg.mxu0
    %v73 = vmax.f32 %v68, 0.0
    %v74 = vmax.f32 %v71, 0.0
    %v75 = vld [vmem:[%s3] sm:$0xff]
    %v76 = vld [vmem:[%s3 + $0x8] sm:$0xff]
    %v77 = vld [vmem:[%s3 + $0x10] sm:$0xff]
    %v78 = vld [vmem:[%s3 + $0x18] sm:$0xff]
    %v79 = vld [vmem:[%s3 + $0x20] sm:$0xff]
    %v80 = vld [vmem:[%s3 + $0x28] sm:$0xff]
    %v81 = vld [vmem:[%s3 + $0x30] sm:$0xff]
    %v82 = vld [vmem:[%s3 + $0x38] sm:$0xff]
    %v83 = vld [vmem:[%s3 + $0x40] sm:$0xff]
    %v84 = vld [vmem:[%s3 + $0x48] sm:$0xff]
    %v85 = vld [vmem:[%s3 + $0x50] sm:$0xff]
    %v86 = vld [vmem:[%s3 + $0x58] sm:$0xff]
    %v87 = vld [vmem:[%s3 + $0x60] sm:$0xff]
    %v88 = vld [vmem:[%s3 + $0x68] sm:$0xff]
    %v89 = vld [vmem:[%s3 + $0x70] sm:$0xff]
    %v90 = vld [vmem:[%s3 + $0x78] sm:$0xff]
    %91 = vmatpush.msra.mxu0 %v90
    %92 = vmatpush.msra.mxu0 %v89
    %93 = vmatpush.msra.mxu0 %v88
    %94 = vmatpush.msra.mxu0 %v87
    %95 = vmatpush.msra.mxu0 %v86
    %96 = vmatpush.msra.mxu0 %v85
    %97 = vmatpush.msra.mxu0 %v84
    %98 = vmatpush.msra.mxu0 %v83
    %99 = vmatpush.msra.mxu0 %v82
    %100 = vmatpush.msra.mxu0 %v81
    %101 = vmatpush.msra.mxu0 %v80
    %102 = vmatpush.msra.mxu0 %v79
    %103 = vmatpush.msra.mxu0 %v78
    %104 = vmatpush.msra.mxu0 %v77
    %105 = vmatpush.msra.mxu0 %v76
    %106 = vmatpush.msra.mxu0 %v75
    %107 = vmatmul.f32.gmra.mxu0 %v73
    %v108 = vpop.f32.mrf.mxu0
    %v109 = vadd.f32 0.0, %v108
    %110 = vmatmul.f32.gmra.mxu0 %v74
    %v111 = vpop.f32.mrf.mxu0
    %v112 = vadd.f32 0.0, %v111
    %113 = vdwg.mxu0
    %v114 = vadd.f32 %v33, %v109
    %v115 = vadd.f32 %v34, %v112
    %v116 = vsel %vm43, %v114, 0.0
    %117 = vadd.xlane.f32.xlu0 %v116
    %v118 = vpop.xlane.xlu0 %117
    %v119 = vsel %vm43, %v115, 0.0
    %120 = vadd.xlane.f32.xlu0 %v119
    %v121 = vpop.xlane.xlu0 %120
    %v122 = vrcp.pop 32.0
    %v123 = vmul.f32 32.0, %v122
    %v124 = vsub.f32 1.0, %v123
    %v125 = vmul.f32 %v122, %v124
    %v126 = vadd.f32 %v122, %v125
    %vm127 = vweird.f32 %v122
    %v128 = vsel %vm127, %v122, %v126
    %v129 = vmul.f32 %v118, %v128
    %v130 = vmul.f32 %v121, %v128
    %v131 = vsub.f32 %v114, %v129
    %v132 = vsub.f32 %v115, %v130
    %v133 = vmul.f32 %v131, %v131
    %v134 = vmul.f32 %v132, %v132
    %v135 = vsel %vm43, %v133, 0.0
    %136 = vadd.xlane.f32.xlu0 %v135
    %v137 = vpop.xlane.xlu0 %136
    %v138 = vsel %vm43, %v134, 0.0
    %139 = vadd.xlane.f32.xlu0 %v138
    %v140 = vpop.xlane.xlu0 %139
    %v141 = vmul.f32 %v137, %v128
    %v142 = vmul.f32 %v140, %v128
    %v143 = vadd.f32 %v141, 1e-05
    %v144 = vadd.f32 %v142, 1e-05
    %v145 = vrsqrt.pop %v143
    %v146 = vmul.f32 %v145, %v143
    %v147 = vmul.f32 %v146, %v145
    %v148 = vmul.f32 0.5, %v147
    %v149 = vsub.f32 1.5, %v148
    %v150 = vmul.f32 %v145, %v149
    %vm151 = vweird.f32 %v143
    %vm152 = vweird.f32 %v145
    %vm153 = vmor %vm151, %vm152
    %v154 = vsel %vm153, %v145, %v150
    %v155 = vrsqrt.pop %v144
    %v156 = vmul.f32 %v155, %v144
    %v157 = vmul.f32 %v156, %v155
    %v158 = vmul.f32 0.5, %v157
    %v159 = vsub.f32 1.5, %v158
    %v160 = vmul.f32 %v155, %v159
    %vm161 = vweird.f32 %v144
    %vm162 = vweird.f32 %v155
    %vm163 = vmor %vm161, %vm162
    %v164 = vsel %vm163, %v155, %v160
    %v165 = vmul.f32 %v131, %v154
    %v166 = vmul.f32 %v132, %v164
    %v167 = vld [vmem:[%s5] sm:$0x1]
    %v169 = vperm.slane %v167, 0
    %v171 = vmul.f32 %v165, %v169
    %v172 = vmul.f32 %v166, %v169
    %v173 = vld [vmem:[%s6] sm:$0x1]
    %v175 = vperm.slane %v173, 0
    %v177 = vadd.f32 %v171, %v175
    %v178 = vadd.f32 %v172, %v175
    %179 = vst.msk [vmem:[#allocation2] sm:$0xff] %vm43, %v177
    %180 = vst.msk [vmem:[#allocation2 + $0x8] sm:$0xff] %vm43, %v178
    // Predicated region
    $region30: #{tpu_custom_call.1} parent=1 // pred_check
      _
    $region31: #{tpu_custom_call.1} parent=1 // pred_check_branch
      %182 = sbr.rel (0) target = $region33
    $region32: #{tpu_custom_call.1} parent=1 // pred_region
      %184 = vsyncadd [#allocation3], 0
      %s185 = sshll.u32 [#allocation2], 4
      %s186 = int_to_ptr.vmem [resolvable:$true] %s185
      %s187 = sshll.u32 %s7, 4
      %s188 = int_to_ptr.hbm [resolvable:$true] %s187
      %193 = dma.vmem_to_hbm [thread:$0]  %s186, 256, %s188, [#allocation3], 128, 128, 8
    $region33: #{tpu_custom_call.1} parent=1 // pred_fallthru
      _
    // Predicated region
    $region34: #{tpu_custom_call.1} parent=1 // pred_check
      _
    $region35: #{tpu_custom_call.1} parent=1 // pred_check_branch
      %195 = sbr.rel (0) target = $region37
    $region36: #{tpu_custom_call.1} parent=1 // pred_region
      %197 = dma.done [#allocation3], 256
    $region37: #{tpu_custom_call.1} parent=1 // pred_fallthru
      _
    %198 = vsyncpa [#allocation3], 1

// kernel: tpu_custom_call.1
$region0: #{tpu_custom_call.1}
  #allocation0 [shape = 'u32[]', space=smem, size = 0x4, offset = 0x4, fixed_abs, tag = 'smem constant byte address 0x4 - core index']
  #allocation1 [shape = 'u32[72,128]{1,0:T(1,128)}', space=vmem, size = 0x9000, scoped, tag = 'internal scratch']
  %s0 = inlined_call_operand.vmem [shape: f32[16,32], index: 0, kind: input, shape index: {}]
  %s1 = inlined_call_operand.vmem [shape: f32[32,128], index: 1, kind: input, shape index: {}]
  %s2 = inlined_call_operand.vmem [shape: f32[1,128], index: 2, kind: input, shape index: {}]
  %s3 = inlined_call_operand.vmem [shape: f32[128,32], index: 3, kind: input, shape index: {}]
  %s4 = inlined_call_operand.vmem [shape: f32[1,32], index: 4, kind: input, shape index: {}]
  %s5 = inlined_call_operand.vmem [shape: f32[1,32], index: 5, kind: input, shape index: {}]
  %s6 = inlined_call_operand.vmem [shape: f32[1,32], index: 6, kind: input, shape index: {}]
  %s7 = inlined_call_operand.hbm [shape: f32[16,32], index: 7, kind: output, shape index: {}]
  %s8 = sld [smem:[#allocation0]]
  $region38: #{tpu_custom_call.1} parent=0
    _
  %s10 = ssub.s32 1, %s8
  %s11 = scalar_select 0, %s10, %s8
  $region1: #{tpu_custom_call.1} parent=0
    #allocation2 [shape = 'u8[8192]{0}', space=vmem, size = 0x2000, scoped, tag = 'output window, operand 0, single buffered']
    #allocation3 [shape = 's32[1]{0}', space=sflag, size = 0x4, scoped, tag = 'scoped memory for tpu_custom_call.1']
    %12 = vsyncpa [#allocation3], 0
    // Predicated region
    $region2: #{tpu_custom_call.1} parent=1 // pred_check
      _
    $region3: #{tpu_custom_call.1} parent=1 // pred_check_branch
      %14 = sbr.rel (0) target = $region5
    $region4: #{tpu_custom_call.1} parent=1 // pred_region
      _
    $region5: #{tpu_custom_call.1} parent=1 // pred_fallthru
      _
    // Predicated region
    $region6: #{tpu_custom_call.1} parent=1 // pred_check
      _
    $region7: #{tpu_custom_call.1} parent=1 // pred_check_branch
      %16 = sbr.rel (0) target = $region9
    $region8: #{tpu_custom_call.1} parent=1 // pred_region
      _
    $region9: #{tpu_custom_call.1} parent=1 // pred_fallthru
      _
    // Predicated region
    $region10: #{tpu_custom_call.1} parent=1 // pred_check
      _
    $region11: #{tpu_custom_call.1} parent=1 // pred_check_branch
      %18 = sbr.rel (0) target = $region13
    $region12: #{tpu_custom_call.1} parent=1 // pred_region
      _
    $region13: #{tpu_custom_call.1} parent=1 // pred_fallthru
      _
    // Predicated region
    $region14: #{tpu_custom_call.1} parent=1 // pred_check
      _
    $region15: #{tpu_custom_call.1} parent=1 // pred_check_branch
      %20 = sbr.rel (0) target = $region17
    $region16: #{tpu_custom_call.1} parent=1 // pred_region
      _
    $region17: #{tpu_custom_call.1} parent=1 // pred_fallthru
      _
    // Predicated region
    $region18: #{tpu_custom_call.1} parent=1 // pred_check
      _
    $region19: #{tpu_custom_call.1} parent=1 // pred_check_branch
      %22 = sbr.rel (0) target = $region21
    $region20: #{tpu_custom_call.1} parent=1 // pred_region
      _
    $region21: #{tpu_custom_call.1} parent=1 // pred_fallthru
      _
    // Predicated region
    $region22: #{tpu_custom_call.1} parent=1 // pred_check
      _
    $region23: #{tpu_custom_call.1} parent=1 // pred_check_branch
      %24 = sbr.rel (0) target = $region25
    $region24: #{tpu_custom_call.1} parent=1 // pred_region
      _
    $region25: #{tpu_custom_call.1} parent=1 // pred_fallthru
      _
    // Predicated region
    $region26: #{tpu_custom_call.1} parent=1 // pred_check
      _
    $region27: #{tpu_custom_call.1} parent=1 // pred_check_branch
      %26 = sbr.rel (0) target = $region29
    $region28: #{tpu_custom_call.1} parent=1 // pred_region
      _
    $region29: #{tpu_custom_call.1} parent=1 // pred_fallthru
      _
    %v27 = vld [vmem:[%s0] sm:$0xff]
    %v28 = vld [vmem:[%s0 + $0x8] sm:$0xff]
    %v29 = vld [vmem:[%s4] sm:$0x1]
    %v31 = vperm.slane %v29, 0
    %v33 = vadd.f32 %v27, %v31
    %v34 = vadd.f32 %v28, %v31
    %v35 = vld [vmem:[%s1] sm:$0xff]
    %v36 = vld [vmem:[%s1 + $0x8] sm:$0xff]
    %v37 = vld [vmem:[%s1 + $0x10] sm:$0xff]
    %v38 = vld [vmem:[%s1 + $0x18] sm:$0xff]
    %v39 = vld [vmem:[%s2] sm:$0x1]
    %v41 = vperm.slane %v39, 0
    %vm43 = vcmask 261120
    %v45 = vsel %vm43, %v27, 0
    %v48 = vsel %vm43, %v28, 0
    %50 = vmatpush.msra.mxu0 0.0
    %51 = vmatpush.msra.mxu0 0.0
    %52 = vmatpush.msra.mxu0 0.0
    %53 = vmatpush.msra.mxu0 0.0
    %54 = vmatpush.msra.mxu0 0.0
    %55 = vmatpush.msra.mxu0 0.0
    %56 = vmatpush.msra.mxu0 0.0
    %57 = vmatpush.msra.mxu0 0.0
    %58 = vmatpush.msra.mxu0 0.0
    %59 = vmatpush.msra.mxu0 0.0
    %60 = vmatpush.msra.mxu0 0.0
    %61 = vmatpush.msra.mxu0 0.0
    %62 = vmatpush.msra.mxu0 %v38
    %63 = vmatpush.msra.mxu0 %v37
    %64 = vmatpush.msra.mxu0 %v36
    %65 = vmatpush.msra.mxu0 %v35
    %66 = vmatmul.f32.gmra.mxu0 %v45
    %v67 = vpop.f32.mrf.mxu0
    %v68 = vadd.f32 %v41, %v67
    %69 = vmatmul.f32.gmra.mxu0 %v48
    %v70 = vpop.f32.mrf.mxu0
    %v71 = vadd.f32 %v41, %v70
    %72 = vdwg.mxu0
    %v73 = vmax.f32 %v68, 0.0
    %v74 = vmax.f32 %v71, 0.0
    %v75 = vld [vmem:[%s3] sm:$0xff]
    %v76 = vld [vmem:[%s3 + $0x8] sm:$0xff]
    %v77 = vld [vmem:[%s3 + $0x10] sm:$0xff]
    %v78 = vld [vmem:[%s3 + $0x18] sm:$0xff]
    %v79 = vld [vmem:[%s3 + $0x20] sm:$0xff]
    %v80 = vld [vmem:[%s3 + $0x28] sm:$0xff]
    %v81 = vld [vmem:[%s3 + $0x30] sm:$0xff]
    %v82 = vld [vmem:[%s3 + $0x38] sm:$0xff]
    %v83 = vld [vmem:[%s3 + $0x40] sm:$0xff]
    %v84 = vld [vmem:[%s3 + $0x48] sm:$0xff]
    %v85 = vld [vmem:[%s3 + $0x50] sm:$0xff]
    %v86 = vld [vmem:[%s3 + $0x58] sm:$0xff]
    %v87 = vld [vmem:[%s3 + $0x60] sm:$0xff]
    %v88 = vld [vmem:[%s3 + $0x68] sm:$0xff]
    %v89 = vld [vmem:[%s3 + $0x70] sm:$0xff]
    %v90 = vld [vmem:[%s3 + $0x78] sm:$0xff]
    %91 = vmatpush.msra.mxu0 %v90
    %92 = vmatpush.msra.mxu0 %v89
    %93 = vmatpush.msra.mxu0 %v88
    %94 = vmatpush.msra.mxu0 %v87
    %95 = vmatpush.msra.mxu0 %v86
    %96 = vmatpush.msra.mxu0 %v85
    %97 = vmatpush.msra.mxu0 %v84
    %98 = vmatpush.msra.mxu0 %v83
    %99 = vmatpush.msra.mxu0 %v82
    %100 = vmatpush.msra.mxu0 %v81
    %101 = vmatpush.msra.mxu0 %v80
    %102 = vmatpush.msra.mxu0 %v79
    %103 = vmatpush.msra.mxu0 %v78
    %104 = vmatpush.msra.mxu0 %v77
    %105 = vmatpush.msra.mxu0 %v76
    %106 = vmatpush.msra.mxu0 %v75
    %107 = vmatmul.f32.gmra.mxu0 %v73
    %v108 = vpop.f32.mrf.mxu0
    %v109 = vadd.f32 0.0, %v108
    %110 = vmatmul.f32.gmra.mxu0 %v74
    %v111 = vpop.f32.mrf.mxu0
    %v112 = vadd.f32 0.0, %v111
    %113 = vdwg.mxu0
    %v114 = vadd.f32 %v33, %v109
    %v115 = vadd.f32 %v34, %v112
    %v116 = vsel %vm43, %v114, 0.0
    %117 = vadd.xlane.f32.xlu0 %v116
    %v118 = vpop.xlane.xlu0 %117
    %v119 = vsel %vm43, %v115, 0.0
    %120 = vadd.xlane.f32.xlu0 %v119
    %v121 = vpop.xlane.xlu0 %120
    %v122 = vrcp.pop 32.0
    %v123 = vmul.f32 32.0, %v122
    %v124 = vsub.f32 1.0, %v123
    %v125 = vmul.f32 %v122, %v124
    %v126 = vadd.f32 %v122, %v125
    %vm127 = vweird.f32 %v122
    %v128 = vsel %vm127, %v122, %v126
    %v129 = vmul.f32 %v118, %v128
    %v130 = vmul.f32 %v121, %v128
    %v131 = vsub.f32 %v114, %v129
    %v132 = vsub.f32 %v115, %v130
    %v133 = vmul.f32 %v131, %v131
    %v134 = vmul.f32 %v132, %v132
    %v135 = vsel %vm43, %v133, 0.0
    %136 = vadd.xlane.f32.xlu0 %v135
    %v137 = vpop.xlane.xlu0 %136
    %v138 = vsel %vm43, %v134, 0.0
    %139 = vadd.xlane.f32.xlu0 %v138
    %v140 = vpop.xlane.xlu0 %139
    %v141 = vmul.f32 %v137, %v128
    %v142 = vmul.f32 %v140, %v128
    %v143 = vadd.f32 %v141, 1e-05
    %v144 = vadd.f32 %v142, 1e-05
    %v145 = vrsqrt.pop %v143
    %v146 = vmul.f32 %v145, %v143
    %v147 = vmul.f32 %v146, %v145
    %v148 = vmul.f32 0.5, %v147
    %v149 = vsub.f32 1.5, %v148
    %v150 = vmul.f32 %v145, %v149
    %vm151 = vweird.f32 %v143
    %vm152 = vweird.f32 %v145
    %vm153 = vmor %vm151, %vm152
    %v154 = vsel %vm153, %v145, %v150
    %v155 = vrsqrt.pop %v144
    %v156 = vmul.f32 %v155, %v144
    %v157 = vmul.f32 %v156, %v155
    %v158 = vmul.f32 0.5, %v157
    %v159 = vsub.f32 1.5, %v158
    %v160 = vmul.f32 %v155, %v159
    %vm161 = vweird.f32 %v144
    %vm162 = vweird.f32 %v155
    %vm163 = vmor %vm161, %vm162
    %v164 = vsel %vm163, %v155, %v160
    %v165 = vmul.f32 %v131, %v154
    %v166 = vmul.f32 %v132, %v164
    %v167 = vld [vmem:[%s5] sm:$0x1]
    %v169 = vperm.slane %v167, 0
    %v171 = vmul.f32 %v165, %v169
    %v172 = vmul.f32 %v166, %v169
    %v173 = vld [vmem:[%s6] sm:$0x1]
    %v175 = vperm.slane %v173, 0
    %v177 = vadd.f32 %v171, %v175
    %v178 = vadd.f32 %v172, %v175
    %179 = vst.msk [vmem:[#allocation2] sm:$0xff] %vm43, %v177
    %180 = vst.msk [vmem:[#allocation2 + $0x8] sm:$0xff] %vm43, %v178
    // Predicated region
    $region30: #{tpu_custom_call.1} parent=1 // pred_check
      _
    $region31: #{tpu_custom_call.1} parent=1 // pred_check_branch
      %182 = sbr.rel (0) target = $region33
    $region32: #{tpu_custom_call.1} parent=1 // pred_region
      %184 = vsyncadd [#allocation3], 0
      %s185 = sshll.u32 [#allocation2], 4
      %s186 = int_to_ptr.vmem [resolvable:$true] %s185
      %s187 = sshll.u32 %s7, 4
      %s188 = int_to_ptr.hbm [resolvable:$true] %s187
      %193 = dma.vmem_to_hbm [thread:$0]  %s186, 256, %s188, [#allocation3], 128, 128, 8
    $region33: #{tpu_custom_call.1} parent=1 // pred_fallthru
      _
    // Predicated region
    $region34: #{tpu_custom_call.1} parent=1 // pred_check
      _
    $region35: #{tpu_custom_call.1} parent=1 // pred_check_branch
      %195 = sbr.rel (0) target = $region37
    $region36: #{tpu_custom_call.1} parent=1 // pred_region
      %197 = dma.done [#allocation3], 256
    $region37: #{tpu_custom_call.1} parent=1 // pred_fallthru
      _
    %198 = vsyncpa [#allocation3], 1

</llo_original>
